<compile_context>
chip_gen: v5e
topology: v5e:2x2
jax: 0.10.0
libtpu: 0.0.40
codegen_flags: <defaults>
</compile_context>

<pallas_src>
import jax
import jax.numpy as jnp
from jax.experimental import pallas as pl
from jax.experimental.pallas import tpu as pltpu


def _rnn_kernel(x_ref, len_ref, invd_ref, wih_ref, whh_ref, b_ref, wo_ref, bo_ref,
                out_ref, h_sc, acc_sc):
    c = pl.program_id(1)                                          # time-chunk index
    TC, TB, E = x_ref.shape
    H = whh_ref.shape[1]

    @pl.when(c == 0)
    def _():
        h_sc[...] = jnp.zeros_like(h_sc)
        acc_sc[...] = jnp.zeros_like(acc_sc)

    # ---- Hoisted input projection: one big MXU matmul for the whole chunk, bias fused.
    #      Result stays in vregs; sliced per unrolled step below (no VMEM round-trip). ----
    x_chunk = x_ref[...].reshape(TC * TB, E)                      # bf16, lane-dense
    xw = jnp.dot(x_chunk, wih_ref[...],
                 preferred_element_type=jnp.float32) + b_ref[...]  # (TC*TB, H) f32

    t0 = c * TC
    lens = len_ref[...]                                           # (TB, 1) int32
    whh = whh_ref[...]                                            # (H, H) f32, loaded once

    h = h_sc[...]
    acc = acc_sc[...]
    # ---- Statically unrolled recurrence: per-step critical path is h @ W_hh + tanh. ----
    for i in range(TC):
        pre = jnp.dot(h, whh, preferred_element_type=jnp.float32) \
            + xw[i * TB:(i + 1) * TB]
        h_new = jnp.tanh(pre)                                     # f32 elementwise (EUP)
        valid = lens > (t0 + i)                                   # packed-seq mask (TB, 1)
        h = jnp.where(valid, h_new, h)                            # freeze past seq length
        acc = acc + jnp.where(valid, h_new, 0.0)                  # padded outputs are zero
    h_sc[...] = h
    acc_sc[...] = acc

    @pl.when(c == pl.num_programs(1) - 1)
    def _():
        feature = acc * invd_ref[...]                             # mean over padded time dim
        # Linear(H, 1) as a VPU multiply + cross-lane reduce (avoid an N=1 MXU matmul).
        logit = jnp.sum(feature * wo_ref[...], axis=-1, keepdims=True) + bo_ref[...]
        out_ref[...] = jax.nn.sigmoid(logit)


def vanilla_rnn_forward(inputs_text, inputs_text_len, params, *, t_chunk=32, b_tile=8):
    """inputs_text: (B, T) int32 token ids; inputs_text_len: (B,) int32 lengths."""
    emb = params["embedding"]            # (V, E)
    w_ih = params["w_ih"]                # (E, H)  (pre-transposed torch weight_ih_l0)
    w_hh = params["w_hh"]                # (H, H)
    b = params["b"]                      # (1, H)  (b_ih + b_hh)
    w_out = params["w_out"]              # (H, 1)
    b_out = params["b_out"]              # (1, 1)

    B, T = inputs_text.shape
    E = emb.shape[1]
    H = w_hh.shape[0]

    LANE, SUB = 128, 8
    E_pad = ((E + LANE - 1) // LANE) * LANE
    H_pad = ((H + LANE - 1) // LANE) * LANE
    TB = max(SUB, ((b_tile + SUB - 1) // SUB) * SUB)              # batch tile (multiple of 8)
    B_pad = ((B + TB - 1) // TB) * TB
    TC = max(1, min(t_chunk, T))                                  # timesteps per grid step
    T_pad = ((T + TC - 1) // TC) * TC

    f32, bf16 = jnp.float32, jnp.bfloat16

    def pad2(a, r, c):
        return jnp.pad(a.astype(f32), ((0, r - a.shape[0]), (0, c - a.shape[1])))

    # Bulk matmul operands (x stream, W_ih) in bf16; recurrence weight W_hh and all
    # elementwise state stay f32.
    emb_p = pad2(emb, emb.shape[0], E_pad).astype(bf16)           # (V, E_pad)
    w_ih_p = pad2(w_ih, E_pad, H_pad).astype(bf16)                # (E_pad, H_pad) bf16
    w_hh_p = pad2(w_hh, H_pad, H_pad)                             # (H_pad, H_pad) f32
    b_p = pad2(b, 1, H_pad)                                       # (1, H_pad) f32
    w_out_row = pad2(w_out.T, 1, H_pad)                           # (1, H_pad) f32
    b_out_p = b_out.astype(f32).reshape(1, 1)

    tok = inputs_text.astype(jnp.int32)
    lens = inputs_text_len.astype(jnp.int32)
    if B_pad != B:
        tok = jnp.pad(tok, ((0, B_pad - B), (0, 0)))
        lens = jnp.pad(lens, (0, B_pad - B))                      # length 0 -> fully masked
    if T_pad != T:
        tok = jnp.pad(tok, ((0, 0), (0, T_pad - T)))              # past-length -> masked

    # Embedding lookup gathered directly time-major (no transpose of the embedded tensor).
    # TODO(synk): for large T*B*E, gather inside the kernel (scalar-prefetched ids + DMA
    # from the HBM-resident table) to avoid materializing x in HBM.
    x = jnp.take(emb_p, tok.T, axis=0)                            # (T_pad, B_pad, E_pad) bf16
    lens2 = lens.reshape(B_pad, 1)
    denom = jnp.maximum(jnp.max(inputs_text_len), 1).astype(f32)  # padded output length, >=1
    inv_denom = (1.0 / denom).reshape(1, 1)

    # Explicit VMEM budget (raises v5e's 16 MiB default; capped at the v6e/v7x default).
    x_blk = TC * TB * E_pad * 2
    wgt = E_pad * H_pad * 2 + H_pad * H_pad * 4 + 3 * H_pad * 4 + 8
    small = 2 * TB * 4 + 16
    scratch = 2 * TB * H_pad * 4
    budget = 2 * (x_blk + wgt + small) + scratch                  # double-buffered streams
    vmem_limit = int(min(max(4 * budget, 16 * 1024 * 1024), 32 * 1024 * 1024))

    grid = (B_pad // TB, T_pad // TC)
    full = lambda bt, c: (0, 0)

    out = pl.pallas_call(
        _rnn_kernel,
        out_shape=jax.ShapeDtypeStruct((B_pad, 1), f32),
        grid_spec=pltpu.PrefetchScalarGridSpec(
            num_scalar_prefetch=0,
            grid=grid,
            in_specs=[
                pl.BlockSpec((TC, TB, E_pad), lambda bt, c: (c, bt, 0)),  # x chunk
                pl.BlockSpec((TB, 1), lambda bt, c: (bt, 0)),             # lengths
                pl.BlockSpec((1, 1), full),                               # 1 / mean denom
                pl.BlockSpec((E_pad, H_pad), full),                       # W_ih^T (bf16)
                pl.BlockSpec((H_pad, H_pad), full),                       # W_hh^T (f32)
                pl.BlockSpec((1, H_pad), full),                           # fused bias
                pl.BlockSpec((1, H_pad), full),                           # output weight row
                pl.BlockSpec((1, 1), full),                               # output bias
            ],
            out_specs=pl.BlockSpec((TB, 1), lambda bt, c: (bt, 0)),
            scratch_shapes=[
                pltpu.VMEM((TB, H_pad), f32),        # hidden state (per batch tile)
                pltpu.VMEM((TB, H_pad), f32),        # sum of masked outputs
            ],
        ),
        compiler_params=pltpu.CompilerParams(
            dimension_semantics=("parallel", "arbitrary"),
            vmem_limit_bytes=vmem_limit,
        ),
    )(x, lens2, inv_denom, w_ih_p, w_hh_p, b_p, w_out_row, b_out_p)
    return out[:B]


def init_params(key, vocab, emb_dim, hidden_dim):
    k = jax.random.split(key, 6)
    s_ih = 1.0 / jnp.sqrt(hidden_dim)
    params = {
        "embedding": jax.random.normal(k[0], (vocab, emb_dim), jnp.float32),
        # torch nn.RNN stores weight_ih_l0 as (H, E); we keep the (E, H) transpose.
        "w_ih": jax.random.uniform(k[1], (emb_dim, hidden_dim), jnp.float32, -s_ih, s_ih),
        "w_hh": jax.random.uniform(k[2], (hidden_dim, hidden_dim), jnp.float32, -s_ih, s_ih),
        "b": jax.random.uniform(k[3], (1, hidden_dim), jnp.float32, -s_ih, s_ih),  # b_ih + b_hh
        "w_out": jax.random.uniform(k[4], (hidden_dim, 1), jnp.float32, -s_ih, s_ih),
        "b_out": jax.random.uniform(k[5], (1, 1), jnp.float32, -s_ih, s_ih),
    }
    return params


if __name__ == "__main__":
    key = jax.random.PRNGKey(0)
    B, T, V, E, H = 8, 8, 50, 32, 32

    k_tok, k_len, k_par = jax.random.split(key, 3)
    inputs_text = jax.random.randint(k_tok, (B, T), 0, V, dtype=jnp.int32)
    inputs_text_len = jax.random.randint(k_len, (B,), 3, T + 1, dtype=jnp.int32)
    inputs_text_len = inputs_text_len.at[0].set(T)   # ensure padded length == T

    params = init_params(k_par, V, E, H)

    out = vanilla_rnn_forward(inputs_text, inputs_text_len, params)
    out = jax.block_until_ready(out)
    assert out.shape == (B, 1) and out.dtype == jnp.float32
    assert bool(jnp.all((out > 0.0) & (out < 1.0)))
    print("KERNEL_OK")
</pallas_src>

<mosaic_0001>
module attributes {stable_mosaic.version = 11 : i64} {
  func.func @_rnn_kernel(%arg0: i32, %arg1: i32, %arg2: memref<8x8x128xbf16, #tpu.memory_space<vmem>>, %arg3: memref<8x1xi32, #tpu.memory_space<vmem>>, %arg4: memref<1x1xf32, #tpu.memory_space<vmem>>, %arg5: memref<128x128xbf16, #tpu.memory_space<vmem>>, %arg6: memref<128x128xf32, #tpu.memory_space<vmem>>, %arg7: memref<1x128xf32, #tpu.memory_space<vmem>>, %arg8: memref<1x128xf32, #tpu.memory_space<vmem>>, %arg9: memref<1x1xf32, #tpu.memory_space<vmem>>, %arg10: memref<8x1xf32, #tpu.memory_space<vmem>>, %arg11: memref<8x128xf32, #tpu.memory_space<vmem>>, %arg12: memref<8x128xf32, #tpu.memory_space<vmem>>) attributes {dimension_semantics = [#tpu.dimension_semantics<parallel>, #tpu.dimension_semantics<arbitrary>], iteration_bounds = array<i64: 1, 1>, scalar_prefetch = 0 : i64, scratch_operands = 2 : i64, tpu.core_type = #tpu.core_type<tc>, window_params = [{transform_indices = @transform_0, window_bounds = array<i64: 8, 8, 128>}, {transform_indices = @transform_1, window_bounds = array<i64: 8, 1>}, {pipeline_mode = #tpu.pipeline_mode<synchronous>, transform_indices = @transform_2, window_bounds = array<i64: 1, 1>}, {pipeline_mode = #tpu.pipeline_mode<synchronous>, transform_indices = @transform_3, window_bounds = array<i64: 128, 128>}, {pipeline_mode = #tpu.pipeline_mode<synchronous>, transform_indices = @transform_4, window_bounds = array<i64: 128, 128>}, {pipeline_mode = #tpu.pipeline_mode<synchronous>, transform_indices = @transform_5, window_bounds = array<i64: 1, 128>}, {pipeline_mode = #tpu.pipeline_mode<synchronous>, transform_indices = @transform_6, window_bounds = array<i64: 1, 128>}, {pipeline_mode = #tpu.pipeline_mode<synchronous>, transform_indices = @transform_7, window_bounds = array<i64: 1, 1>}, {transform_indices = @transform_8, window_bounds = array<i64: 8, 1>}]} {
    %c0_i32 = arith.constant 0 : i32
    %0 = arith.cmpi eq, %arg1, %c0_i32 : i32
    %1 = arith.extui %0 : i1 to i32
    %c0_i32_0 = arith.constant 0 : i32
    %2 = arith.cmpi ne, %1, %c0_i32_0 : i32
    scf.if %2 {
      %cst_38 = arith.constant 0.000000e+00 : f32
      %140 = vector.broadcast %cst_38 : f32 to vector<8x128xf32>
      %c0_39 = arith.constant 0 : index
      %c0_40 = arith.constant 0 : index
      %141 = vector.load %arg11[%c0_39, %c0_40] : memref<8x128xf32, #tpu.memory_space<vmem>>, vector<8x128xf32>
      tpu.vector_store %arg11[%c0_39, %c0_40], %140 {strides = array<i32>} : memref<8x128xf32, #tpu.memory_space<vmem>>, vector<8x128xf32>,
      %cst_41 = arith.constant 0.000000e+00 : f32
      %142 = vector.broadcast %cst_41 : f32 to vector<8x128xf32>
      %c0_42 = arith.constant 0 : index
      %c0_43 = arith.constant 0 : index
      %143 = vector.load %arg12[%c0_42, %c0_43] : memref<8x128xf32, #tpu.memory_space<vmem>>, vector<8x128xf32>
      tpu.vector_store %arg12[%c0_42, %c0_43], %142 {strides = array<i32>} : memref<8x128xf32, #tpu.memory_space<vmem>>, vector<8x128xf32>,
    } else {
    }
    %c0 = arith.constant 0 : index
    %c0_1 = arith.constant 0 : index
    %c0_2 = arith.constant 0 : index
    %3 = vector.load %arg2[%c0, %c0_1, %c0_2] : memref<8x8x128xbf16, #tpu.memory_space<vmem>>, vector<8x8x128xbf16>
    %4 = vector.shape_cast %3 : vector<8x8x128xbf16> to vector<64x128xbf16>
    %c0_3 = arith.constant 0 : index
    %c0_4 = arith.constant 0 : index
    %5 = vector.load %arg5[%c0_3, %c0_4] : memref<128x128xbf16, #tpu.memory_space<vmem>>, vector<128x128xbf16>
    %cst = arith.constant dense<0.000000e+00> : vector<64x128xf32>
    %6 = tpu.matmul %4, %5, %cst {dimension_numbers = #tpu.dot_dimension_numbers<[1], [0], [0], [1], [0, 0, 1, 1], [], []>} : vector<64x128xbf16>, vector<128x128xbf16>, vector<64x128xf32> -> vector<64x128xf32>
    %c0_5 = arith.constant 0 : index
    %c0_6 = arith.constant 0 : index
    %7 = vector.load %arg7[%c0_5, %c0_6] : memref<1x128xf32, #tpu.memory_space<vmem>>, vector<1x128xf32>
    %8 = vector.broadcast %7 : vector<1x128xf32> to vector<64x128xf32>
    %9 = arith.addf %6, %8 : vector<64x128xf32>
    %c8_i32 = arith.constant 8 : i32
    %10 = arith.muli %arg1, %c8_i32 : i32
    %c0_7 = arith.constant 0 : index
    %c0_8 = arith.constant 0 : index
    %11 = vector.load %arg3[%c0_7, %c0_8] : memref<8x1xi32, #tpu.memory_space<vmem>>, vector<8x1xi32>
    %c0_9 = arith.constant 0 : index
    %c0_10 = arith.constant 0 : index
    %12 = vector.load %arg6[%c0_9, %c0_10] : memref<128x128xf32, #tpu.memory_space<vmem>>, vector<128x128xf32>
    %c0_11 = arith.constant 0 : index
    %c0_12 = arith.constant 0 : index
    %13 = vector.load %arg11[%c0_11, %c0_12] : memref<8x128xf32, #tpu.memory_space<vmem>>, vector<8x128xf32>
    %c0_13 = arith.constant 0 : index
    %c0_14 = arith.constant 0 : index
    %14 = vector.load %arg12[%c0_13, %c0_14] : memref<8x128xf32, #tpu.memory_space<vmem>>, vector<8x128xf32>
    %cst_15 = arith.constant dense<0.000000e+00> : vector<8x128xf32>
    %15 = tpu.matmul %13, %12, %cst_15 {dimension_numbers = #tpu.dot_dimension_numbers<[1], [0], [0], [1], [0, 0, 1, 1], [], []>} : vector<8x128xf32>, vector<128x128xf32>, vector<8x128xf32> -> vector<8x128xf32>
    %16 = vector.extract_strided_slice %9 {offsets = [0, 0], sizes = [8, 128], strides = [1, 1]} : vector<64x128xf32> to vector<8x128xf32>
    %17 = arith.addf %15, %16 : vector<8x128xf32>
    %18 = math.tanh %17 : vector<8x128xf32>
    %c0_i32_16 = arith.constant 0 : i32
    %19 = arith.addi %10, %c0_i32_16 : i32
    %20 = vector.broadcast %19 : i32 to vector<8x1xi32>
    %21 = arith.cmpi sgt, %11, %20 : vector<8x1xi32>
    %22 = vector.shape_cast %21 : vector<8x1xi1> to vector<8x1xi1>
    %23 = vector.broadcast %22 : vector<8x1xi1> to vector<8x128xi1>
    %24 = arith.select %23, %18, %13 : vector<8x128xi1>, vector<8x128xf32>
    %cst_17 = arith.constant 0.000000e+00 : f32
    %25 = vector.shape_cast %21 : vector<8x1xi1> to vector<8x1xi1>
    %26 = vector.broadcast %25 : vector<8x1xi1> to vector<8x128xi1>
    %27 = vector.broadcast %cst_17 : f32 to vector<8x128xf32>
    %28 = arith.select %26, %18, %27 : vector<8x128xi1>, vector<8x128xf32>
    %29 = arith.addf %14, %28 : vector<8x128xf32>
    %cst_18 = arith.constant dense<0.000000e+00> : vector<8x128xf32>
    %30 = tpu.matmul %24, %12, %cst_18 {dimension_numbers = #tpu.dot_dimension_numbers<[1], [0], [0], [1], [0, 0, 1, 1], [], []>} : vector<8x128xf32>, vector<128x128xf32>, vector<8x128xf32> -> vector<8x128xf32>
    %31 = vector.extract_strided_slice %9 {offsets = [8, 0], sizes = [8, 128], strides = [1, 1]} : vector<64x128xf32> to vector<8x128xf32>
    %32 = arith.addf %30, %31 : vector<8x128xf32>
    %33 = math.tanh %32 : vector<8x128xf32>
    %c1_i32 = arith.constant 1 : i32
    %34 = arith.addi %10, %c1_i32 : i32
    %35 = vector.broadcast %34 : i32 to vector<8x1xi32>
    %36 = arith.cmpi sgt, %11, %35 : vector<8x1xi32>
    %37 = vector.shape_cast %36 : vector<8x1xi1> to vector<8x1xi1>
    %38 = vector.broadcast %37 : vector<8x1xi1> to vector<8x128xi1>
    %39 = arith.select %38, %33, %24 : vector<8x128xi1>, vector<8x128xf32>
    %cst_19 = arith.constant 0.000000e+00 : f32
    %40 = vector.shape_cast %36 : vector<8x1xi1> to vector<8x1xi1>
    %41 = vector.broadcast %40 : vector<8x1xi1> to vector<8x128xi1>
    %42 = vector.broadcast %cst_19 : f32 to vector<8x128xf32>
    %43 = arith.select %41, %33, %42 : vector<8x128xi1>, vector<8x128xf32>
    %44 = arith.addf %29, %43 : vector<8x128xf32>
    %cst_20 = arith.constant dense<0.000000e+00> : vector<8x128xf32>
    %45 = tpu.matmul %39, %12, %cst_20 {dimension_numbers = #tpu.dot_dimension_numbers<[1], [0], [0], [1], [0, 0, 1, 1], [], []>} : vector<8x128xf32>, vector<128x128xf32>, vector<8x128xf32> -> vector<8x128xf32>
    %46 = vector.extract_strided_slice %9 {offsets = [16, 0], sizes = [8, 128], strides = [1, 1]} : vector<64x128xf32> to vector<8x128xf32>
    %47 = arith.addf %45, %46 : vector<8x128xf32>
    %48 = math.tanh %47 : vector<8x128xf32>
    %c2_i32 = arith.constant 2 : i32
    %49 = arith.addi %10, %c2_i32 : i32
    %50 = vector.broadcast %49 : i32 to vector<8x1xi32>
    %51 = arith.cmpi sgt, %11, %50 : vector<8x1xi32>
    %52 = vector.shape_cast %51 : vector<8x1xi1> to vector<8x1xi1>
    %53 = vector.broadcast %52 : vector<8x1xi1> to vector<8x128xi1>
    %54 = arith.select %53, %48, %39 : vector<8x128xi1>, vector<8x128xf32>
    %cst_21 = arith.constant 0.000000e+00 : f32
    %55 = vector.shape_cast %51 : vector<8x1xi1> to vector<8x1xi1>
    %56 = vector.broadcast %55 : vector<8x1xi1> to vector<8x128xi1>
    %57 = vector.broadcast %cst_21 : f32 to vector<8x128xf32>
    %58 = arith.select %56, %48, %57 : vector<8x128xi1>, vector<8x128xf32>
    %59 = arith.addf %44, %58 : vector<8x128xf32>
    %cst_22 = arith.constant dense<0.000000e+00> : vector<8x128xf32>
    %60 = tpu.matmul %54, %12, %cst_22 {dimension_numbers = #tpu.dot_dimension_numbers<[1], [0], [0], [1], [0, 0, 1, 1], [], []>} : vector<8x128xf32>, vector<128x128xf32>, vector<8x128xf32> -> vector<8x128xf32>
    %61 = vector.extract_strided_slice %9 {offsets = [24, 0], sizes = [8, 128], strides = [1, 1]} : vector<64x128xf32> to vector<8x128xf32>
    %62 = arith.addf %60, %61 : vector<8x128xf32>
    %63 = math.tanh %62 : vector<8x128xf32>
    %c3_i32 = arith.constant 3 : i32
    %64 = arith.addi %10, %c3_i32 : i32
    %65 = vector.broadcast %64 : i32 to vector<8x1xi32>
    %66 = arith.cmpi sgt, %11, %65 : vector<8x1xi32>
    %67 = vector.shape_cast %66 : vector<8x1xi1> to vector<8x1xi1>
    %68 = vector.broadcast %67 : vector<8x1xi1> to vector<8x128xi1>
    %69 = arith.select %68, %63, %54 : vector<8x128xi1>, vector<8x128xf32>
    %cst_23 = arith.constant 0.000000e+00 : f32
    %70 = vector.shape_cast %66 : vector<8x1xi1> to vector<8x1xi1>
    %71 = vector.broadcast %70 : vector<8x1xi1> to vector<8x128xi1>
    %72 = vector.broadcast %cst_23 : f32 to vector<8x128xf32>
    %73 = arith.select %71, %63, %72 : vector<8x128xi1>, vector<8x128xf32>
    %74 = arith.addf %59, %73 : vector<8x128xf32>
    %cst_24 = arith.constant dense<0.000000e+00> : vector<8x128xf32>
    %75 = tpu.matmul %69, %12, %cst_24 {dimension_numbers = #tpu.dot_dimension_numbers<[1], [0], [0], [1], [0, 0, 1, 1], [], []>} : vector<8x128xf32>, vector<128x128xf32>, vector<8x128xf32> -> vector<8x128xf32>
    %76 = vector.extract_strided_slice %9 {offsets = [32, 0], sizes = [8, 128], strides = [1, 1]} : vector<64x128xf32> to vector<8x128xf32>
    %77 = arith.addf %75, %76 : vector<8x128xf32>
    %78 = math.tanh %77 : vector<8x128xf32>
    %c4_i32 = arith.constant 4 : i32
    %79 = arith.addi %10, %c4_i32 : i32
    %80 = vector.broadcast %79 : i32 to vector<8x1xi32>
    %81 = arith.cmpi sgt, %11, %80 : vector<8x1xi32>
    %82 = vector.shape_cast %81 : vector<8x1xi1> to vector<8x1xi1>
    %83 = vector.broadcast %82 : vector<8x1xi1> to vector<8x128xi1>
    %84 = arith.select %83, %78, %69 : vector<8x128xi1>, vector<8x128xf32>
    %cst_25 = arith.constant 0.000000e+00 : f32
    %85 = vector.shape_cast %81 : vector<8x1xi1> to vector<8x1xi1>
    %86 = vector.broadcast %85 : vector<8x1xi1> to vector<8x128xi1>
    %87 = vector.broadcast %cst_25 : f32 to vector<8x128xf32>
    %88 = arith.select %86, %78, %87 : vector<8x128xi1>, vector<8x128xf32>
    %89 = arith.addf %74, %88 : vector<8x128xf32>
    %cst_26 = arith.constant dense<0.000000e+00> : vector<8x128xf32>
    %90 = tpu.matmul %84, %12, %cst_26 {dimension_numbers = #tpu.dot_dimension_numbers<[1], [0], [0], [1], [0, 0, 1, 1], [], []>} : vector<8x128xf32>, vector<128x128xf32>, vector<8x128xf32> -> vector<8x128xf32>
    %91 = vector.extract_strided_slice %9 {offsets = [40, 0], sizes = [8, 128], strides = [1, 1]} : vector<64x128xf32> to vector<8x128xf32>
    %92 = arith.addf %90, %91 : vector<8x128xf32>
    %93 = math.tanh %92 : vector<8x128xf32>
    %c5_i32 = arith.constant 5 : i32
    %94 = arith.addi %10, %c5_i32 : i32
    %95 = vector.broadcast %94 : i32 to vector<8x1xi32>
    %96 = arith.cmpi sgt, %11, %95 : vector<8x1xi32>
    %97 = vector.shape_cast %96 : vector<8x1xi1> to vector<8x1xi1>
    %98 = vector.broadcast %97 : vector<8x1xi1> to vector<8x128xi1>
    %99 = arith.select %98, %93, %84 : vector<8x128xi1>, vector<8x128xf32>
    %cst_27 = arith.constant 0.000000e+00 : f32
    %100 = vector.shape_cast %96 : vector<8x1xi1> to vector<8x1xi1>
    %101 = vector.broadcast %100 : vector<8x1xi1> to vector<8x128xi1>
    %102 = vector.broadcast %cst_27 : f32 to vector<8x128xf32>
    %103 = arith.select %101, %93, %102 : vector<8x128xi1>, vector<8x128xf32>
    %104 = arith.addf %89, %103 : vector<8x128xf32>
    %cst_28 = arith.constant dense<0.000000e+00> : vector<8x128xf32>
    %105 = tpu.matmul %99, %12, %cst_28 {dimension_numbers = #tpu.dot_dimension_numbers<[1], [0], [0], [1], [0, 0, 1, 1], [], []>} : vector<8x128xf32>, vector<128x128xf32>, vector<8x128xf32> -> vector<8x128xf32>
    %106 = vector.extract_strided_slice %9 {offsets = [48, 0], sizes = [8, 128], strides = [1, 1]} : vector<64x128xf32> to vector<8x128xf32>
    %107 = arith.addf %105, %106 : vector<8x128xf32>
    %108 = math.tanh %107 : vector<8x128xf32>
    %c6_i32 = arith.constant 6 : i32
    %109 = arith.addi %10, %c6_i32 : i32
    %110 = vector.broadcast %109 : i32 to vector<8x1xi32>
    %111 = arith.cmpi sgt, %11, %110 : vector<8x1xi32>
    %112 = vector.shape_cast %111 : vector<8x1xi1> to vector<8x1xi1>
    %113 = vector.broadcast %112 : vector<8x1xi1> to vector<8x128xi1>
    %114 = arith.select %113, %108, %99 : vector<8x128xi1>, vector<8x128xf32>
    %cst_29 = arith.constant 0.000000e+00 : f32
    %115 = vector.shape_cast %111 : vector<8x1xi1> to vector<8x1xi1>
    %116 = vector.broadcast %115 : vector<8x1xi1> to vector<8x128xi1>
    %117 = vector.broadcast %cst_29 : f32 to vector<8x128xf32>
    %118 = arith.select %116, %108, %117 : vector<8x128xi1>, vector<8x128xf32>
    %119 = arith.addf %104, %118 : vector<8x128xf32>
    %cst_30 = arith.constant dense<0.000000e+00> : vector<8x128xf32>
    %120 = tpu.matmul %114, %12, %cst_30 {dimension_numbers = #tpu.dot_dimension_numbers<[1], [0], [0], [1], [0, 0, 1, 1], [], []>} : vector<8x128xf32>, vector<128x128xf32>, vector<8x128xf32> -> vector<8x128xf32>
    %121 = vector.extract_strided_slice %9 {offsets = [56, 0], sizes = [8, 128], strides = [1, 1]} : vector<64x128xf32> to vector<8x128xf32>
    %122 = arith.addf %120, %121 : vector<8x128xf32>
    %123 = math.tanh %122 : vector<8x128xf32>
    %c7_i32 = arith.constant 7 : i32
    %124 = arith.addi %10, %c7_i32 : i32
    %125 = vector.broadcast %124 : i32 to vector<8x1xi32>
    %126 = arith.cmpi sgt, %11, %125 : vector<8x1xi32>
    %127 = vector.shape_cast %126 : vector<8x1xi1> to vector<8x1xi1>
    %128 = vector.broadcast %127 : vector<8x1xi1> to vector<8x128xi1>
    %129 = arith.select %128, %123, %114 : vector<8x128xi1>, vector<8x128xf32>
    %cst_31 = arith.constant 0.000000e+00 : f32
    %130 = vector.shape_cast %126 : vector<8x1xi1> to vector<8x1xi1>
    %131 = vector.broadcast %130 : vector<8x1xi1> to vector<8x128xi1>
    %132 = vector.broadcast %cst_31 : f32 to vector<8x128xf32>
    %133 = arith.select %131, %123, %132 : vector<8x128xi1>, vector<8x128xf32>
    %134 = arith.addf %119, %133 : vector<8x128xf32>
    %c0_32 = arith.constant 0 : index
    %c0_33 = arith.constant 0 : index
    %135 = vector.load %arg11[%c0_32, %c0_33] : memref<8x128xf32, #tpu.memory_space<vmem>>, vector<8x128xf32>
    tpu.vector_store %arg11[%c0_32, %c0_33], %129 {strides = array<i32>} : memref<8x128xf32, #tpu.memory_space<vmem>>, vector<8x128xf32>,
    %c0_34 = arith.constant 0 : index
    %c0_35 = arith.constant 0 : index
    %136 = vector.load %arg12[%c0_34, %c0_35] : memref<8x128xf32, #tpu.memory_space<vmem>>, vector<8x128xf32>
    tpu.vector_store %arg12[%c0_34, %c0_35], %134 {strides = array<i32>} : memref<8x128xf32, #tpu.memory_space<vmem>>, vector<8x128xf32>,
    %c0_i32_36 = arith.constant 0 : i32
    %137 = arith.cmpi eq, %arg1, %c0_i32_36 : i32
    %138 = arith.extui %137 : i1 to i32
    %c0_i32_37 = arith.constant 0 : i32
    %139 = arith.cmpi ne, %138, %c0_i32_37 : i32
    scf.if %139 {
      %c0_38 = arith.constant 0 : index
      %c0_39 = arith.constant 0 : index
      %140 = vector.load %arg4[%c0_38, %c0_39] : memref<1x1xf32, #tpu.memory_space<vmem>>, vector<1x1xf32>
      %141 = vector.broadcast %140 : vector<1x1xf32> to vector<8x128xf32>
      %142 = arith.mulf %134, %141 : vector<8x128xf32>
      %c0_40 = arith.constant 0 : index
      %c0_41 = arith.constant 0 : index
      %143 = vector.load %arg8[%c0_40, %c0_41] : memref<1x128xf32, #tpu.memory_space<vmem>>, vector<1x128xf32>
      %144 = vector.broadcast %143 : vector<1x128xf32> to vector<8x128xf32>
      %145 = arith.mulf %142, %144 : vector<8x128xf32>
      %cst_42 = arith.constant dense<0.000000e+00> : vector<8xf32>
      %146 = vector.multi_reduction <add>, %145, %cst_42 [1] : vector<8x128xf32> to vector<8xf32>
      %147 = vector.shape_cast %146 : vector<8xf32> to vector<8x1xf32>
      %c0_43 = arith.constant 0 : index
      %c0_44 = arith.constant 0 : index
      %148 = vector.load %arg9[%c0_43, %c0_44] : memref<1x1xf32, #tpu.memory_space<vmem>>, vector<1x1xf32>
      %149 = vector.broadcast %148 : vector<1x1xf32> to vector<8x1xf32>
      %150 = arith.addf %147, %149 : vector<8x1xf32>
      %151 = arith.negf %150 : vector<8x1xf32>
      %152 = math.exp %151 : vector<8x1xf32>
      %cst_45 = arith.constant 1.000000e+00 : f32
      %153 = vector.broadcast %cst_45 : f32 to vector<8x1xf32>
      %154 = arith.addf %153, %152 : vector<8x1xf32>
      %155 = arith.divf %153, %154 : vector<8x1xf32>
      %c0_46 = arith.constant 0 : index
      %c0_47 = arith.constant 0 : index
      %156 = vector.load %arg10[%c0_46, %c0_47] : memref<8x1xf32, #tpu.memory_space<vmem>>, vector<8x1xf32>
      tpu.vector_store %arg10[%c0_46, %c0_47], %155 {strides = array<i32>} : memref<8x1xf32, #tpu.memory_space<vmem>>, vector<8x1xf32>,
    } else {
    }
    return
  }
  func.func @transform_0(%arg0: i32, %arg1: i32) -> (i32, i32, i32) {
    %c0_i32 = arith.constant 0 : i32
    %c0_i32_0 = arith.constant 0 : i32
    return %arg1, %arg0, %c0_i32 : i32, i32, i32
  }
  func.func @transform_1(%arg0: i32, %arg1: i32) -> (i32, i32) {
    %c0_i32 = arith.constant 0 : i32
    %c0_i32_0 = arith.constant 0 : i32
    return %arg0, %c0_i32 : i32, i32
  }
  func.func @transform_2(%arg0: i32, %arg1: i32) -> (i32, i32) {
    %c0_i32 = arith.constant 0 : i32
    %c0_i32_0 = arith.constant 0 : i32
    %c0_i32_1 = arith.constant 0 : i32
    return %c0_i32, %c0_i32_0 : i32, i32
  }
  func.func @transform_3(%arg0: i32, %arg1: i32) -> (i32, i32) {
    %c0_i32 = arith.constant 0 : i32
    %c0_i32_0 = arith.constant 0 : i32
    %c0_i32_1 = arith.constant 0 : i32
    return %c0_i32, %c0_i32_0 : i32, i32
  }
  func.func @transform_4(%arg0: i32, %arg1: i32) -> (i32, i32) {
    %c0_i32 = arith.constant 0 : i32
    %c0_i32_0 = arith.constant 0 : i32
    %c0_i32_1 = arith.constant 0 : i32
    return %c0_i32, %c0_i32_0 : i32, i32
  }
  func.func @transform_5(%arg0: i32, %arg1: i32) -> (i32, i32) {
    %c0_i32 = arith.constant 0 : i32
    %c0_i32_0 = arith.constant 0 : i32
    %c0_i32_1 = arith.constant 0 : i32
    return %c0_i32, %c0_i32_0 : i32, i32
  }
  func.func @transform_6(%arg0: i32, %arg1: i32) -> (i32, i32) {
    %c0_i32 = arith.constant 0 : i32
    %c0_i32_0 = arith.constant 0 : i32
    %c0_i32_1 = arith.constant 0 : i32
    return %c0_i32, %c0_i32_0 : i32, i32
  }
  func.func @transform_7(%arg0: i32, %arg1: i32) -> (i32, i32) {
    %c0_i32 = arith.constant 0 : i32
    %c0_i32_0 = arith.constant 0 : i32
    %c0_i32_1 = arith.constant 0 : i32
    return %c0_i32, %c0_i32_0 : i32, i32
  }
  func.func @transform_8(%arg0: i32, %arg1: i32) -> (i32, i32) {
    %c0_i32 = arith.constant 0 : i32
    %c0_i32_0 = arith.constant 0 : i32
    return %arg0, %c0_i32 : i32, i32
  }
}

</mosaic_0001>

<llo_original>
// kernel: tpu_custom_call.1
$region0: #{tpu_custom_call.1}
  #allocation0 [shape = 'u32[]', space=smem, size = 0x4, offset = 0x4, fixed_abs, tag = 'smem constant byte address 0x4 - core index']
  #allocation1 [shape = 'u32[72,128]{1,0:T(1,128)}', space=vmem, size = 0x9000, scoped, tag = 'internal scratch']
  #allocation2 [shape = 'f32[8,128]{1,0:T(8,128)}', space=vmem, size = 0x1000, scoped, tag = 'scratch operand']
  #allocation3 [shape = 'f32[8,128]{1,0:T(8,128)}', space=vmem, size = 0x1000, scoped, tag = 'scratch operand']
  #allocation4 [shape = 'f32[1,1]{1,0:T(1,128)S(1)}', space=vmem, size = 0x200, scoped, tag = 'scoped memory for tpu_custom_call.1']
  #allocation5 [shape = 'f32[1,1]{1,0:T(1,128)S(1)}', space=vmem, size = 0x200, scoped, tag = 'scoped memory for tpu_custom_call.1']
  %s0 = inlined_call_operand.hbm [shape: bf16[8,8,128], index: 0, kind: input, shape index: {}]
  %s1 = inlined_call_operand.vmem [shape: s32[8,1], index: 1, kind: input, shape index: {}]
  %s2 = inlined_call_operand.<no memory space> [shape: f32[1,1], index: 2, kind: input, shape index: {}]
  %s3 = inlined_call_operand.hbm [shape: bf16[128,128], index: 3, kind: input, shape index: {}]
  %s4 = inlined_call_operand.hbm [shape: f32[128,128], index: 4, kind: input, shape index: {}]
  %s5 = inlined_call_operand.vmem [shape: f32[1,128], index: 5, kind: input, shape index: {}]
  %s6 = inlined_call_operand.vmem [shape: f32[1,128], index: 6, kind: input, shape index: {}]
  %s7 = inlined_call_operand.<no memory space> [shape: f32[1,1], index: 7, kind: input, shape index: {}]
  %s8 = inlined_call_operand.vmem [shape: f32[8,1], index: 8, kind: output, shape index: {}]
  %s9 = sld [smem:[#allocation0]]
  $region62: #{tpu_custom_call.1} parent=0
    _
  %s11 = ssub.s32 1, %s9
  %s12 = scalar_select 0, %s11, %s9
  %v13 = vstv %s2
  %14 = vst [vmem:[#allocation4] sm:$0x1] %v13
  %v15 = vstv %s7
  %16 = vst [vmem:[#allocation5] sm:$0x1] %v15
  $region1: #{tpu_custom_call.1} parent=0
    #allocation6 [shape = 'u8[16384]{0}', space=vmem, size = 0x4000, scoped, tag = 'input window, operand 0, single buffered']
    #allocation7 [shape = 's32[1]{0}', space=sflag, size = 0x4, scoped, tag = 'scoped memory for tpu_custom_call.1']
    #allocation8 [shape = 'u8[32768]{0}', space=vmem, size = 0x8000, scoped, tag = 'input window, operand 3, single buffered']
    #allocation9 [shape = 's32[1]{0}', space=sflag, size = 0x4, scoped, tag = 'scoped memory for tpu_custom_call.1']
    #allocation10 [shape = 'u8[65536]{0}', space=vmem, size = 0x10000, scoped, tag = 'input window, operand 4, single buffered']
    %17 = vsyncpa [#allocation7], 0
    %18 = vsyncpa [#allocation9], 0
    // Predicated region
    $region2: #{tpu_custom_call.1} parent=1 // pred_check
      _
    $region3: #{tpu_custom_call.1} parent=1 // pred_check_branch
      %20 = sbr.rel (0) target = $region5
    $region4: #{tpu_custom_call.1} parent=1 // pred_region
      %22 = vsyncadd [#allocation7], 0
      %s23 = sshll.u32 %s0, 4
      %s24 = int_to_ptr.hbm [resolvable:$true] %s23
      %s25 = sshll.u32 [#allocation6], 4
      %s26 = int_to_ptr.vmem [resolvable:$true] %s25
      %31 = dma.hbm_to_vmem [thread:$0]  %s24, 512, %s26, [#allocation7], 64, 64, 4
    $region5: #{tpu_custom_call.1} parent=1 // pred_fallthru
      _
    // Predicated region
    $region6: #{tpu_custom_call.1} parent=1 // pred_check
      _
    $region7: #{tpu_custom_call.1} parent=1 // pred_check_branch
      %33 = sbr.rel (0) target = $region9
    $region8: #{tpu_custom_call.1} parent=1 // pred_region
      _
    $region9: #{tpu_custom_call.1} parent=1 // pred_fallthru
      _
    // Predicated region
    $region10: #{tpu_custom_call.1} parent=1 // pred_check
      _
    $region11: #{tpu_custom_call.1} parent=1 // pred_check_branch
      %35 = sbr.rel (0) target = $region13
    $region12: #{tpu_custom_call.1} parent=1 // pred_region
      _
    $region13: #{tpu_custom_call.1} parent=1 // pred_fallthru
      _
    // Predicated region
    $region14: #{tpu_custom_call.1} parent=1 // pred_check
      _
    $region15: #{tpu_custom_call.1} parent=1 // pred_check_branch
      %37 = sbr.rel (0) target = $region17
    $region16: #{tpu_custom_call.1} parent=1 // pred_region
      %39 = vsyncadd [#allocation9], 0
      %s40 = sshll.u32 %s3, 4
      %s41 = int_to_ptr.hbm [resolvable:$true] %s40
      %s42 = sshll.u32 [#allocation8], 4
      %s43 = int_to_ptr.vmem [resolvable:$true] %s42
      %48 = dma.hbm_to_vmem [thread:$0]  %s41, 1024, %s43, [#allocation9], 64, 64, 4
    $region17: #{tpu_custom_call.1} parent=1 // pred_fallthru
      _
    // Predicated region
    $region18: #{tpu_custom_call.1} parent=1 // pred_check
      _
    $region19: #{tpu_custom_call.1} parent=1 // pred_check_branch
      %50 = sbr.rel (0) target = $region21
    $region20: #{tpu_custom_call.1} parent=1 // pred_region
      %52 = vsyncadd [#allocation9], 0
      %s53 = sshll.u32 %s4, 4
      %s54 = int_to_ptr.hbm [resolvable:$true] %s53
      %s55 = sshll.u32 [#allocation10], 4
      %s56 = int_to_ptr.vmem [resolvable:$true] %s55
      %61 = dma.hbm_to_vmem [thread:$0]  %s54, 2048, %s56, [#allocation9], 128, 128, 8
    $region21: #{tpu_custom_call.1} parent=1 // pred_fallthru
      _
    // Predicated region
    $region22: #{tpu_custom_call.1} parent=1 // pred_check
      _
    $region23: #{tpu_custom_call.1} parent=1 // pred_check_branch
      %63 = sbr.rel (0) target = $region25
    $region24: #{tpu_custom_call.1} parent=1 // pred_region
      _
    $region25: #{tpu_custom_call.1} parent=1 // pred_fallthru
      _
    // Predicated region
    $region26: #{tpu_custom_call.1} parent=1 // pred_check
      _
    $region27: #{tpu_custom_call.1} parent=1 // pred_check_branch
      %65 = sbr.rel (0) target = $region29
    $region28: #{tpu_custom_call.1} parent=1 // pred_region
      _
    $region29: #{tpu_custom_call.1} parent=1 // pred_fallthru
      _
    // Predicated region
    $region30: #{tpu_custom_call.1} parent=1 // pred_check
      _
    $region31: #{tpu_custom_call.1} parent=1 // pred_check_branch
      %67 = sbr.rel (0) target = $region33
    $region32: #{tpu_custom_call.1} parent=1 // pred_region
      _
    $region33: #{tpu_custom_call.1} parent=1 // pred_fallthru
      _
    // Predicated region
    $region34: #{tpu_custom_call.1} parent=1 // pred_check
      _
    $region35: #{tpu_custom_call.1} parent=1 // pred_check_branch
      %69 = sbr.rel (0) target = $region37
    $region36: #{tpu_custom_call.1} parent=1 // pred_region
      %71 = dma.done [#allocation7], 512
    $region37: #{tpu_custom_call.1} parent=1 // pred_fallthru
      _
    // Predicated region
    $region38: #{tpu_custom_call.1} parent=1 // pred_check
      _
    $region39: #{tpu_custom_call.1} parent=1 // pred_check_branch
      %73 = sbr.rel (0) target = $region41
    $region40: #{tpu_custom_call.1} parent=1 // pred_region
      %75 = dma.done [#allocation9], 1024
    $region41: #{tpu_custom_call.1} parent=1 // pred_fallthru
      _
    // Predicated region
    $region42: #{tpu_custom_call.1} parent=1 // pred_check
      _
    $region43: #{tpu_custom_call.1} parent=1 // pred_check_branch
      %77 = sbr.rel (0) target = $region45
    $region44: #{tpu_custom_call.1} parent=1 // pred_region
      %79 = dma.done [#allocation9], 2048
    $region45: #{tpu_custom_call.1} parent=1 // pred_fallthru
      _
    %p80 = scmp.eq.s32.totalorder 0, 0
    // Predicated region
    $region46: #{tpu_custom_call.1} parent=1 // pred_check
      %p81 = pneg %p80
    $region47: #{tpu_custom_call.1} parent=1 // pred_check_branch
      %83 = sbr.rel (%p81) target = $region49
    $region48: #{tpu_custom_call.1} parent=1 // pred_region
      %84 = vst [vmem:[#allocation2] sm:$0xff] 0.0
      %85 = vst [vmem:[#allocation3] sm:$0xff] 0.0
    $region49: #{tpu_custom_call.1} parent=1 // pred_fallthru
      _
    %v86 = vld [vmem:[#allocation6] sm:$0xf]
    %v87 = vld [vmem:[#allocation6 + $0x4] sm:$0xf]
    %v88 = vld [vmem:[#allocation6 + $0x8] sm:$0xf]
    %v89 = vld [vmem:[#allocation6 + $0xc] sm:$0xf]
    %v90 = vld [vmem:[#allocation6 + $0x10] sm:$0xf]
    %v91 = vld [vmem:[#allocation6 + $0x14] sm:$0xf]
    %v92 = vld [vmem:[#allocation6 + $0x18] sm:$0xf]
    %v93 = vld [vmem:[#allocation6 + $0x1c] sm:$0xf]
    %v94 = vld [vmem:[#allocation8] sm:$0xf]
    %v95 = vld [vmem:[#allocation8 + $0x4] sm:$0xf]
    %v96 = vld [vmem:[#allocation8 + $0x8] sm:$0xf]
    %v97 = vld [vmem:[#allocation8 + $0xc] sm:$0xf]
    %v98 = vld [vmem:[#allocation8 + $0x10] sm:$0xf]
    %v99 = vld [vmem:[#allocation8 + $0x14] sm:$0xf]
    %v100 = vld [vmem:[#allocation8 + $0x18] sm:$0xf]
    %v101 = vld [vmem:[#allocation8 + $0x1c] sm:$0xf]
    %v102 = vld [vmem:[#allocation8 + $0x20] sm:$0xf]
    %v103 = vld [vmem:[#allocation8 + $0x24] sm:$0xf]
    %v104 = vld [vmem:[#allocation8 + $0x28] sm:$0xf]
    %v105 = vld [vmem:[#allocation8 + $0x2c] sm:$0xf]
    %v106 = vld [vmem:[#allocation8 + $0x30] sm:$0xf]
    %v107 = vld [vmem:[#allocation8 + $0x34] sm:$0xf]
    %v108 = vld [vmem:[#allocation8 + $0x38] sm:$0xf]
    %v109 = vld [vmem:[#allocation8 + $0x3c] sm:$0xf]
    %v110 = vld [vmem:[%s5] sm:$0x1]
    %v112 = vperm.slane %v110, 0
    %v122 = vunpack.c.l.b16 %v86
    %v123 = vunpack.c.l.b16 %v87
    %v124 = vunpack.c.l.b16 %v88
    %v125 = vunpack.c.l.b16 %v89
    %v126 = vunpack.c.l.b16 %v90
    %v127 = vunpack.c.l.b16 %v91
    %v128 = vunpack.c.l.b16 %v92
    %v129 = vunpack.c.l.b16 %v93
    %v130 = vpack.c.b16 %v123, %v122
    %v131 = vpack.c.b16 %v125, %v124
    %v132 = vpack.c.b16 %v127, %v126
    %v133 = vpack.c.b16 %v129, %v128
    %v154 = vunpack.c.l.b16 %v94
    %v155 = vunpack.c.l.b16 %v95
    %v156 = vunpack.c.l.b16 %v96
    %v157 = vunpack.c.l.b16 %v97
    %v158 = vunpack.c.l.b16 %v98
    %v159 = vunpack.c.l.b16 %v99
    %v160 = vunpack.c.l.b16 %v100
    %v161 = vunpack.c.l.b16 %v101
    %v162 = vunpack.c.l.b16 %v102
    %v163 = vunpack.c.l.b16 %v103
    %v164 = vunpack.c.l.b16 %v104
    %v165 = vunpack.c.l.b16 %v105
    %v166 = vunpack.c.l.b16 %v106
    %v167 = vunpack.c.l.b16 %v107
    %v168 = vunpack.c.l.b16 %v108
    %v169 = vunpack.c.l.b16 %v109
    %v170 = vpack.c.b16 %v155, %v154
    %v171 = vpack.c.b16 %v157, %v156
    %v172 = vpack.c.b16 %v159, %v158
    %v173 = vpack.c.b16 %v161, %v160
    %v174 = vpack.c.b16 %v163, %v162
    %v175 = vpack.c.b16 %v165, %v164
    %v176 = vpack.c.b16 %v167, %v166
    %v177 = vpack.c.b16 %v169, %v168
    %186 = vmatpush.bf16.msra.mxu0 %v177
    %187 = vmatpush.bf16.msra.mxu0 %v176
    %188 = vmatpush.bf16.msra.mxu0 %v175
    %189 = vmatpush.bf16.msra.mxu0 %v174
    %190 = vmatpush.bf16.msra.mxu0 %v173
    %191 = vmatpush.bf16.msra.mxu0 %v172
    %192 = vmatpush.bf16.msra.mxu0 %v171
    %193 = vmatpush.bf16.msra.mxu0 %v170
    %194 = vmatmul.bf16.gmra.mxu0 %v130
    %v195 = vpop.f32.mrf.mxu0
    %v196 = vadd.f32 %v112, %v195
    %v197 = vpop.f32.mrf.mxu0
    %v198 = vadd.f32 %v112, %v197
    %199 = vmatmul.bf16.gmra.mxu0 %v131
    %v200 = vpop.f32.mrf.mxu0
    %v201 = vadd.f32 %v112, %v200
    %v202 = vpop.f32.mrf.mxu0
    %v203 = vadd.f32 %v112, %v202
    %204 = vmatmul.bf16.gmra.mxu0 %v132
    %v205 = vpop.f32.mrf.mxu0
    %v206 = vadd.f32 %v112, %v205
    %v207 = vpop.f32.mrf.mxu0
    %v208 = vadd.f32 %v112, %v207
    %209 = vmatmul.bf16.gmra.mxu0 %v133
    %v210 = vpop.f32.mrf.mxu0
    %v211 = vadd.f32 %v112, %v210
    %v212 = vpop.f32.mrf.mxu0
    %v213 = vadd.f32 %v112, %v212
    %214 = vdwg.mxu0
    %s215 = smul.u32 0, 8
    %v216 = vld [vmem:[%s1] sm:$0xff]
    %v217 = vld [vmem:[#allocation10] sm:$0xff]
    %v218 = vld [vmem:[#allocation10 + $0x8] sm:$0xff]
    %v219 = vld [vmem:[#allocation10 + $0x10] sm:$0xff]
    %v220 = vld [vmem:[#allocation10 + $0x18] sm:$0xff]
    %v221 = vld [vmem:[#allocation10 + $0x20] sm:$0xff]
    %v222 = vld [vmem:[#allocation10 + $0x28] sm:$0xff]
    %v223 = vld [vmem:[#allocation10 + $0x30] sm:$0xff]
    %v224 = vld [vmem:[#allocation10 + $0x38] sm:$0xff]
    %v225 = vld [vmem:[#allocation10 + $0x40] sm:$0xff]
    %v226 = vld [vmem:[#allocation10 + $0x48] sm:$0xff]
    %v227 = vld [vmem:[#allocation10 + $0x50] sm:$0xff]
    %v228 = vld [vmem:[#allocation10 + $0x58] sm:$0xff]
    %v229 = vld [vmem:[#allocation10 + $0x60] sm:$0xff]
    %v230 = vld [vmem:[#allocation10 + $0x68] sm:$0xff]
    %v231 = vld [vmem:[#allocation10 + $0x70] sm:$0xff]
    %v232 = vld [vmem:[#allocation10 + $0x78] sm:$0xff]
    %v233 = vld [vmem:[#allocation2] sm:$0xff]
    %v234 = vld [vmem:[#allocation3] sm:$0xff]
    %235 = vmatpush.msra.mxu0 %v232
    %236 = vmatpush.msra.mxu0 %v231
    %237 = vmatpush.msra.mxu0 %v230
    %238 = vmatpush.msra.mxu0 %v229
    %239 = vmatpush.msra.mxu0 %v228
    %240 = vmatpush.msra.mxu0 %v227
    %241 = vmatpush.msra.mxu0 %v226
    %242 = vmatpush.msra.mxu0 %v225
    %243 = vmatpush.msra.mxu0 %v224
    %244 = vmatpush.msra.mxu0 %v223
    %245 = vmatpush.msra.mxu0 %v222
    %246 = vmatpush.msra.mxu0 %v221
    %247 = vmatpush.msra.mxu0 %v220
    %248 = vmatpush.msra.mxu0 %v219
    %249 = vmatpush.msra.mxu0 %v218
    %250 = vmatpush.msra.mxu0 %v217
    %251 = vmatmul.f32.gmra.mxu0 %v233
    %v252 = vpop.f32.mrf.mxu0
    %v253 = vadd.f32 %v196, %v252
    %254 = vdwg.mxu0
    %v255 = vtanh.pop %v253
    %v256 = vstv %s215
    %vm257 = vcmp.gt.s32.totalorder %v216, %v256
    %v258 = vsel %vm257, 1, 0
    %259 = vset.pattern.permute.xlu0 0
    %260 = vperm.xlu0 %259, %v258
    %v261 = vpop.permute.xlu0 %260
    %vm262 = vcmp.eq.s32.totalorder %v261, 1
    %v263 = vsel %vm262, %v255, %v233
    %v264 = vsel %vm262, %v255, 0.0
    %v265 = vadd.f32 %v234, %v264
    %266 = vmatpush.msra.mxu0 %v232
    %267 = vmatpush.msra.mxu0 %v231
    %268 = vmatpush.msra.mxu0 %v230
    %269 = vmatpush.msra.mxu0 %v229
    %270 = vmatpush.msra.mxu0 %v228
    %271 = vmatpush.msra.mxu0 %v227
    %272 = vmatpush.msra.mxu0 %v226
    %273 = vmatpush.msra.mxu0 %v225
    %274 = vmatpush.msra.mxu0 %v224
    %275 = vmatpush.msra.mxu0 %v223
    %276 = vmatpush.msra.mxu0 %v222
    %277 = vmatpush.msra.mxu0 %v221
    %278 = vmatpush.msra.mxu0 %v220
    %279 = vmatpush.msra.mxu0 %v219
    %280 = vmatpush.msra.mxu0 %v218
    %281 = vmatpush.msra.mxu0 %v217
    %282 = vmatmul.f32.gmra.mxu0 %v263
    %v283 = vpop.f32.mrf.mxu0
    %v284 = vadd.f32 %v198, %v283
    %285 = vdwg.mxu0
    %v286 = vtanh.pop %v284
    %s287 = sadd.s32 %s215, 1
    %v288 = vstv %s287
    %vm289 = vcmp.gt.s32.totalorder %v216, %v288
    %v290 = vsel %vm289, 1, 0
    %291 = vset.pattern.permute.xlu0 0
    %292 = vperm.xlu0 %291, %v290
    %v293 = vpop.permute.xlu0 %292
    %vm294 = vcmp.eq.s32.totalorder %v293, 1
    %v295 = vsel %vm294, %v286, %v263
    %v296 = vsel %vm294, %v286, 0.0
    %v297 = vadd.f32 %v265, %v296
    %298 = vmatpush.msra.mxu0 %v232
    %299 = vmatpush.msra.mxu0 %v231
    %300 = vmatpush.msra.mxu0 %v230
    %301 = vmatpush.msra.mxu0 %v229
    %302 = vmatpush.msra.mxu0 %v228
    %303 = vmatpush.msra.mxu0 %v227
    %304 = vmatpush.msra.mxu0 %v226
    %305 = vmatpush.msra.mxu0 %v225
    %306 = vmatpush.msra.mxu0 %v224
    %307 = vmatpush.msra.mxu0 %v223
    %308 = vmatpush.msra.mxu0 %v222
    %309 = vmatpush.msra.mxu0 %v221
    %310 = vmatpush.msra.mxu0 %v220
    %311 = vmatpush.msra.mxu0 %v219
    %312 = vmatpush.msra.mxu0 %v218
    %313 = vmatpush.msra.mxu0 %v217
    %314 = vmatmul.f32.gmra.mxu0 %v295
    %v315 = vpop.f32.mrf.mxu0
    %v316 = vadd.f32 %v201, %v315
    %317 = vdwg.mxu0
    %v318 = vtanh.pop %v316
    %s319 = sadd.s32 %s215, 2
    %v320 = vstv %s319
    %vm321 = vcmp.gt.s32.totalorder %v216, %v320
    %v322 = vsel %vm321, 1, 0
    %323 = vset.pattern.permute.xlu0 0
    %324 = vperm.xlu0 %323, %v322
    %v325 = vpop.permute.xlu0 %324
    %vm326 = vcmp.eq.s32.totalorder %v325, 1
    %v327 = vsel %vm326, %v318, %v295
    %v328 = vsel %vm326, %v318, 0.0
    %v329 = vadd.f32 %v297, %v328
    %330 = vmatpush.msra.mxu0 %v232
    %331 = vmatpush.msra.mxu0 %v231
    %332 = vmatpush.msra.mxu0 %v230
    %333 = vmatpush.msra.mxu0 %v229
    %334 = vmatpush.msra.mxu0 %v228
    %335 = vmatpush.msra.mxu0 %v227
    %336 = vmatpush.msra.mxu0 %v226
    %337 = vmatpush.msra.mxu0 %v225
    %338 = vmatpush.msra.mxu0 %v224
    %339 = vmatpush.msra.mxu0 %v223
    %340 = vmatpush.msra.mxu0 %v222
    %341 = vmatpush.msra.mxu0 %v221
    %342 = vmatpush.msra.mxu0 %v220
    %343 = vmatpush.msra.mxu0 %v219
    %344 = vmatpush.msra.mxu0 %v218
    %345 = vmatpush.msra.mxu0 %v217
    %346 = vmatmul.f32.gmra.mxu0 %v327
    %v347 = vpop.f32.mrf.mxu0
    %v348 = vadd.f32 %v203, %v347
    %349 = vdwg.mxu0
    %v350 = vtanh.pop %v348
    %s351 = sadd.s32 %s215, 3
    %v352 = vstv %s351
    %vm353 = vcmp.gt.s32.totalorder %v216, %v352
    %v354 = vsel %vm353, 1, 0
    %355 = vset.pattern.permute.xlu0 0
    %356 = vperm.xlu0 %355, %v354
    %v357 = vpop.permute.xlu0 %356
    %vm358 = vcmp.eq.s32.totalorder %v357, 1
    %v359 = vsel %vm358, %v350, %v327
    %v360 = vsel %vm358, %v350, 0.0
    %v361 = vadd.f32 %v329, %v360
    %362 = vmatpush.msra.mxu0 %v232
    %363 = vmatpush.msra.mxu0 %v231
    %364 = vmatpush.msra.mxu0 %v230
    %365 = vmatpush.msra.mxu0 %v229
    %366 = vmatpush.msra.mxu0 %v228
    %367 = vmatpush.msra.mxu0 %v227
    %368 = vmatpush.msra.mxu0 %v226
    %369 = vmatpush.msra.mxu0 %v225
    %370 = vmatpush.msra.mxu0 %v224
    %371 = vmatpush.msra.mxu0 %v223
    %372 = vmatpush.msra.mxu0 %v222
    %373 = vmatpush.msra.mxu0 %v221
    %374 = vmatpush.msra.mxu0 %v220
    %375 = vmatpush.msra.mxu0 %v219
    %376 = vmatpush.msra.mxu0 %v218
    %377 = vmatpush.msra.mxu0 %v217
    %378 = vmatmul.f32.gmra.mxu0 %v359
    %v379 = vpop.f32.mrf.mxu0
    %v380 = vadd.f32 %v206, %v379
    %381 = vdwg.mxu0
    %v382 = vtanh.pop %v380
    %s383 = sadd.s32 %s215, 4
    %v384 = vstv %s383
    %vm385 = vcmp.gt.s32.totalorder %v216, %v384
    %v386 = vsel %vm385, 1, 0
    %387 = vset.pattern.permute.xlu0 0
    %388 = vperm.xlu0 %387, %v386
    %v389 = vpop.permute.xlu0 %388
    %vm390 = vcmp.eq.s32.totalorder %v389, 1
    %v391 = vsel %vm390, %v382, %v359
    %v392 = vsel %vm390, %v382, 0.0
    %v393 = vadd.f32 %v361, %v392
    %394 = vmatpush.msra.mxu0 %v232
    %395 = vmatpush.msra.mxu0 %v231
    %396 = vmatpush.msra.mxu0 %v230
    %397 = vmatpush.msra.mxu0 %v229
    %398 = vmatpush.msra.mxu0 %v228
    %399 = vmatpush.msra.mxu0 %v227
    %400 = vmatpush.msra.mxu0 %v226
    %401 = vmatpush.msra.mxu0 %v225
    %402 = vmatpush.msra.mxu0 %v224
    %403 = vmatpush.msra.mxu0 %v223
    %404 = vmatpush.msra.mxu0 %v222
    %405 = vmatpush.msra.mxu0 %v221
    %406 = vmatpush.msra.mxu0 %v220
    %407 = vmatpush.msra.mxu0 %v219
    %408 = vmatpush.msra.mxu0 %v218
    %409 = vmatpush.msra.mxu0 %v217
    %410 = vmatmul.f32.gmra.mxu0 %v391
    %v411 = vpop.f32.mrf.mxu0
    %v412 = vadd.f32 %v208, %v411
    %413 = vdwg.mxu0
    %v414 = vtanh.pop %v412
    %s415 = sadd.s32 %s215, 5
    %v416 = vstv %s415
    %vm417 = vcmp.gt.s32.totalorder %v216, %v416
    %v418 = vsel %vm417, 1, 0
    %419 = vset.pattern.permute.xlu0 0
    %420 = vperm.xlu0 %419, %v418
    %v421 = vpop.permute.xlu0 %420
    %vm422 = vcmp.eq.s32.totalorder %v421, 1
    %v423 = vsel %vm422, %v414, %v391
    %v424 = vsel %vm422, %v414, 0.0
    %v425 = vadd.f32 %v393, %v424
    %426 = vmatpush.msra.mxu0 %v232
    %427 = vmatpush.msra.mxu0 %v231
    %428 = vmatpush.msra.mxu0 %v230
    %429 = vmatpush.msra.mxu0 %v229
    %430 = vmatpush.msra.mxu0 %v228
    %431 = vmatpush.msra.mxu0 %v227
    %432 = vmatpush.msra.mxu0 %v226
    %433 = vmatpush.msra.mxu0 %v225
    %434 = vmatpush.msra.mxu0 %v224
    %435 = vmatpush.msra.mxu0 %v223
    %436 = vmatpush.msra.mxu0 %v222
    %437 = vmatpush.msra.mxu0 %v221
    %438 = vmatpush.msra.mxu0 %v220
    %439 = vmatpush.msra.mxu0 %v219
    %440 = vmatpush.msra.mxu0 %v218
    %441 = vmatpush.msra.mxu0 %v217
    %442 = vmatmul.f32.gmra.mxu0 %v423
    %v443 = vpop.f32.mrf.mxu0
    %v444 = vadd.f32 %v211, %v443
    %445 = vdwg.mxu0
    %v446 = vtanh.pop %v444
    %s447 = sadd.s32 %s215, 6
    %v448 = vstv %s447
    %vm449 = vcmp.gt.s32.totalorder %v216, %v448
    %v450 = vsel %vm449, 1, 0
    %451 = vset.pattern.permute.xlu0 0
    %452 = vperm.xlu0 %451, %v450
    %v453 = vpop.permute.xlu0 %452
    %vm454 = vcmp.eq.s32.totalorder %v453, 1
    %v455 = vsel %vm454, %v446, %v423
    %v456 = vsel %vm454, %v446, 0.0
    %v457 = vadd.f32 %v425, %v456
    %458 = vmatpush.msra.mxu0 %v232
    %459 = vmatpush.msra.mxu0 %v231
    %460 = vmatpush.msra.mxu0 %v230
    %461 = vmatpush.msra.mxu0 %v229
    %462 = vmatpush.msra.mxu0 %v228
    %463 = vmatpush.msra.mxu0 %v227
    %464 = vmatpush.msra.mxu0 %v226
    %465 = vmatpush.msra.mxu0 %v225
    %466 = vmatpush.msra.mxu0 %v224
    %467 = vmatpush.msra.mxu0 %v223
    %468 = vmatpush.msra.mxu0 %v222
    %469 = vmatpush.msra.mxu0 %v221
    %470 = vmatpush.msra.mxu0 %v220
    %471 = vmatpush.msra.mxu0 %v219
    %472 = vmatpush.msra.mxu0 %v218
    %473 = vmatpush.msra.mxu0 %v217
    %474 = vmatmul.f32.gmra.mxu0 %v455
    %v475 = vpop.f32.mrf.mxu0
    %v476 = vadd.f32 %v213, %v475
    %477 = vdwg.mxu0
    %v478 = vtanh.pop %v476
    %s479 = sadd.s32 %s215, 7
    %v480 = vstv %s479
    %vm481 = vcmp.gt.s32.totalorder %v216, %v480
    %v482 = vsel %vm481, 1, 0
    %483 = vset.pattern.permute.xlu0 0
    %484 = vperm.xlu0 %483, %v482
    %v485 = vpop.permute.xlu0 %484
    %vm486 = vcmp.eq.s32.totalorder %v485, 1
    %v487 = vsel %vm486, %v478, %v455
    %v488 = vsel %vm486, %v478, 0.0
    %v489 = vadd.f32 %v457, %v488
    %490 = vst [vmem:[#allocation2] sm:$0xff] %v487
    %491 = vst [vmem:[#allocation3] sm:$0xff] %v489
    // Predicated region
    $region50: #{tpu_custom_call.1} parent=1 // pred_check
      %p492 = pneg %p80
    $region51: #{tpu_custom_call.1} parent=1 // pred_check_branch
      %494 = sbr.rel (%p492) target = $region53
    $region52: #{tpu_custom_call.1} parent=1 // pred_region
      %v495 = vld [vmem:[#allocation4] sm:$0x1]
      %v497 = vperm.slane %v495, 0
      %498 = vset.pattern.permute.xlu0 0
      %499 = vperm.xlu0 %498, %v497
      %v500 = vpop.permute.xlu0 %499
      %v502 = vmul.f32 %v489, %v500
      %v503 = vld [vmem:[%s6] sm:$0x1]
      %v505 = vperm.slane %v503, 0
      %v507 = vmul.f32 %v502, %v505
      %508 = vadd.xlane.f32.xlu0 %v507
      %v509 = vpop.xlane.xlu0 %508
      %v510 = vld [vmem:[#allocation5] sm:$0x1]
      %v512 = vperm.slane %v510, 0
      %v514 = vadd.f32 %v509, %v512
      %v515 = vxor.u32 %v514, 2147483648
      %v516 = vmul.f32 %v515, 1.442695
      %v517 = vpow.pop %v516
      %v518 = vadd.f32 %v517, 1.0
      %v519 = vrcp.pop %v518
      %v520 = vmul.f32 %v518, %v519
      %v521 = vsub.f32 1.0, %v520
      %v522 = vmul.f32 %v519, %v521
      %v523 = vadd.f32 %v519, %v522
      %vm524 = vweird.f32 %v518
      %vm525 = vweird.f32 %v519
      %vm526 = vmor %vm524, %vm525
      %v527 = vsel %vm526, %v519, %v523
      %v528 = vand.u32 2147483647, %v518
      %vm529 = vcmp.eq.f32.partialorder %v528, 8.507059e+37
      %v530 = vand.u32 %v518, 2147483648
      %v531 = vor.u32 1.1754944e-38, %v530
      %v532 = vsel %vm529, %v531, %v527
      %v533 = vmul.f32 1.0, %v532
      %vm534 = vcmask 7168
      %535 = vst.msk [vmem:[%s8] sm:$0xff] %vm534, %v533
    $region53: #{tpu_custom_call.1} parent=1 // pred_fallthru
      _
    // Predicated region
    $region54: #{tpu_custom_call.1} parent=1 // pred_check
      _
    $region55: #{tpu_custom_call.1} parent=1 // pred_check_branch
      %537 = sbr.rel (0) target = $region57
    $region56: #{tpu_custom_call.1} parent=1 // pred_region
      _
    $region57: #{tpu_custom_call.1} parent=1 // pred_fallthru
      _
    // Predicated region
    $region58: #{tpu_custom_call.1} parent=1 // pred_check
      _
    $region59: #{tpu_custom_call.1} parent=1 // pred_check_branch
      %539 = sbr.rel (0) target = $region61
    $region60: #{tpu_custom_call.1} parent=1 // pred_region
      _
    $region61: #{tpu_custom_call.1} parent=1 // pred_fallthru
      _
    %540 = vsyncpa [#allocation7], 1
    %541 = vsyncpa [#allocation9], 1

</llo_original>
